<compile_context>
chip_gen: v6e
topology: v6e:2x2x1
jax: 0.10.0
libtpu: 0.0.40
codegen_flags: <defaults>
</compile_context>

<pallas_src>
import functools

import numpy as np
import jax
import jax.numpy as jnp
from jax import lax
from jax.experimental import pallas as pl
from jax.experimental.pallas import tpu as pltpu

LANES = 128            # vreg lane width (fast axis)
SUBLANE_PACK = 32      # block-row granularity: satisfies f32 (8,128) and uint8 (32,128) tiling
MAX_BLOCK_ROWS = 2048  # (2048,128) f32 block = 1 MiB -> amortises per-grid-step overhead
PAD_LABEL = 2          # not in {0,1,255}: padded elements contribute nothing to any partial


def _bcl_kernel(margin, total_rows, dist_ref, lab_ref, out_ref):
    """One grid step: lane-partial sums (pos_cnt, neg_cnt, loss1_num, loss2_num).

    dist_ref: (block_rows, 128) float (f32 or bf16)
    lab_ref : (block_rows, 128) raw labels (0=no-change, 1=change, 255=ignore),
              integer or float dtype.
    out_ref : (1, 8, 128) f32; rows 0..3 hold the partials, rows 4..7 are zero
              (padded to a full (8,128) tile so the write is one unmasked store).

    `total_rows` is None when the grid evenly tiles the row dimension; otherwise
    it is the true row count and the out-of-bounds tail of the last block (whose
    contents are unspecified) is masked out.
    """
    block_rows = dist_ref.shape[0]

    # Compare labels in their native domain (integers widened to i32 in-register,
    # floats compared as floats) -- no f32 unpack of the label stream.
    lab = lab_ref[...]
    if jnp.issubdtype(lab.dtype, jnp.floating):
        if lab.dtype != jnp.float32:
            lab = lab.astype(jnp.float32)
    else:
        if lab.dtype != jnp.int32:
            lab = lab.astype(jnp.int32)
    is_pos = lab == 0          # torch relabel: 0 -> +1
    is_neg = lab == 1          # torch relabel: 1 -> -1

    d = dist_ref[...]
    if d.dtype != jnp.float32:
        d = d.astype(jnp.float32)

    if total_rows is not None:
        # Ragged last block: rows at or past `total_rows` hold unspecified data.
        row0 = pl.program_id(0) * block_rows
        rid = row0 + lax.broadcasted_iota(jnp.int32, (block_rows, LANES), 0)
        valid = rid < total_rows
        is_pos = jnp.logical_and(is_pos, valid)
        is_neg = jnp.logical_and(is_neg, valid)
        d = jnp.where(valid, d, 0.0)   # also neutralises possible NaN garbage

    posf = is_pos.astype(jnp.float32)
    negf = is_neg.astype(jnp.float32)

    # Labels in {0,1,255}: distance masking only matters for 255-pixels, whose
    # loss_1 term is 0 and whose loss_2 term is the constant -127*margin^2 added
    # back in the wrapper, so the per-element math collapses to ~10 VPU ops.
    t1 = posf * (d * d)                         # loss_1 numerator terms
    c = jnp.maximum(margin - d, 0.0)
    t2 = negf * (c * c)                         # loss_2 numerator terms (pos/neg pixels)

    # Sublane (axis-0) partial reductions; the cross-lane + cross-block combine
    # is a tiny XLA op in the wrapper.  Single full-tile (8,128) store.
    out_ref[0, :, :] = jnp.concatenate([
        jnp.sum(posf, axis=0, keepdims=True),
        jnp.sum(negf, axis=0, keepdims=True),
        jnp.sum(t1, axis=0, keepdims=True),
        jnp.sum(t2, axis=0, keepdims=True),
        jnp.zeros((4, LANES), jnp.float32),
    ], axis=0)


def _round_up(x, m):
    return ((x + m - 1) // m) * m


def bcl_loss(distance, label, margin=2.0):
    """Batch-balanced contrastive loss (forward), matching the torch BCL module.

    Labels must take values in {0, 1, 255} (0 = no-change, 1 = change,
    255 = ignore) but may be stored in any integer or float dtype; they are fed
    to the kernel in their native dtype (uint8 labels => 1 B/elem HBM traffic).
    `distance` may be float32 or bfloat16 (bf16 halves its HBM traffic;
    accumulation is always f32 inside the kernel).
    """
    margin = float(margin)

    d = distance.reshape(-1)
    if d.dtype not in (jnp.float32, jnp.bfloat16):
        d = d.astype(jnp.float32)
    l = label.reshape(-1)          # native dtype: no wrapper-side cast pass over HBM

    n_true = d.shape[0]
    n = n_true

    # Lane alignment.  Only when the element count is not a multiple of 128 do
    # we pay one pad pass (there is no copy-free reshape to (rows, 128) then).
    # TODO(synk): a fully pad-free path for n % 128 != 0 would need manual DMA
    # on the flat 1-D arrays (memory_space=pl.ANY) plus in-kernel lane masking.
    rem = n % LANES
    if rem:
        tail = LANES - rem
        d = jnp.pad(d, (0, tail))
        l = jnp.pad(l, (0, tail), constant_values=PAD_LABEL)
        n += tail
    rows = n // LANES

    if rows < SUBLANE_PACK:
        # Tiny input (< 4K elements): pad up to one 32-row block (few KiB, free).
        extra = SUBLANE_PACK - rows
        d = jnp.pad(d, (0, extra * LANES))
        l = jnp.pad(l, (0, extra * LANES), constant_values=PAD_LABEL)
        rows = SUBLANE_PACK
        block_rows = SUBLANE_PACK
    else:
        # Largest block <= MAX_BLOCK_ROWS while guaranteeing >= 2 grid steps
        # whenever possible (v7x has 2 TensorCores; "parallel" shards the grid).
        block_rows = min(MAX_BLOCK_ROWS, _round_up(pl.cdiv(rows, 2), SUBLANE_PACK))
    num_blocks = pl.cdiv(rows, block_rows)
    ragged = (rows % block_rows) != 0          # last block partially out of bounds

    d2 = d.reshape(rows, LANES)                # contiguous reshape: no HBM copy
    l2 = l.reshape(rows, LANES)

    partials = pl.pallas_call(
        functools.partial(_bcl_kernel, margin, rows if ragged else None),
        out_shape=jax.ShapeDtypeStruct((num_blocks, 8, LANES), jnp.float32),
        grid_spec=pltpu.PrefetchScalarGridSpec(
            num_scalar_prefetch=0,
            grid=(num_blocks,),
            in_specs=[
                pl.BlockSpec((block_rows, LANES), lambda i: (i, 0)),
                pl.BlockSpec((block_rows, LANES), lambda i: (i, 0)),
            ],
            out_specs=pl.BlockSpec((1, 8, LANES), lambda i: (i, 0, 0)),
        ),
        compiler_params=pltpu.CompilerParams(
            dimension_semantics=("parallel",),     # independent blocks -> megacore-friendly
            vmem_limit_bytes=32 * 1024 * 1024,
        ),
    )(d2, l2)

    sums = jnp.sum(partials[:, :4, :], axis=(0, 2))       # tiny XLA combine: (4,)
    pos_cnt, neg_cnt, loss1_num, loss2_pn = sums[0], sums[1], sums[2], sums[3]
    # label==255 pixels: masked distance is 0, so each contributes exactly
    # (1-255)/2 * clamp(margin, 0)^2 = -127*margin^2 to the loss_2 numerator.
    ign_cnt = jnp.float32(n_true) - pos_cnt - neg_cnt
    loss2_num = loss2_pn + ign_cnt * (-127.0 * max(margin, 0.0) ** 2)
    pos_num = pos_cnt + 0.0001
    neg_num = neg_cnt + 0.0001
    return loss1_num / pos_num + loss2_num / neg_num


def _bcl_ref(distance_f32, label, margin=2.0):
    """float64 numpy reference mirroring the torch forward exactly."""
    lab = np.asarray(label).astype(np.float64)
    lab = np.where(lab == 1.0, -1.0, np.where(lab == 0.0, 1.0, lab))
    mask = (lab != 255.0).astype(np.float64)
    dd = np.asarray(distance_f32).astype(np.float64) * mask
    pos_num = np.sum(lab == 1.0) + 0.0001
    neg_num = np.sum(lab == -1.0) + 0.0001
    loss_1 = np.sum((1.0 + lab) / 2.0 * dd * dd) / pos_num
    loss_2 = np.sum((1.0 - lab) / 2.0 * np.maximum(margin - dd, 0.0) ** 2) / neg_num
    return loss_1 + loss_2


if __name__ == "__main__":
    key = jax.random.PRNGKey(0)
    k1, k2, k3, k4, k5, k6 = jax.random.split(key, 6)

    # --- small lane-aligned NCHW input: 2*4*16*16 = 2048 elements -------------
    shape = (2, 4, 16, 16)
    distance = jax.random.uniform(k1, shape, jnp.float32, 0.0, 3.0)
    change = jax.random.bernoulli(k2, 0.4, shape)
    ignore = jax.random.bernoulli(k3, 0.05, shape)
    label_u8 = jnp.where(ignore, jnp.uint8(255), change.astype(jnp.uint8))
    label_f32 = label_u8.astype(jnp.float32)

    loss = bcl_loss(distance, label_u8, margin=2.0)
    jax.block_until_ready(loss)
    ref = _bcl_ref(distance, label_u8, margin=2.0)
    assert np.allclose(float(loss), ref, rtol=1e-3, atol=1e-3), (float(loss), ref)

    # float labels go straight into the kernel (no wrapper cast pass)
    loss_f = bcl_loss(distance, label_f32, margin=2.0)
    assert np.allclose(float(loss_f), ref, rtol=1e-3, atol=1e-3), (float(loss_f), ref)

    # --- ragged input (n % 128 != 0, rows % block_rows != 0): exercises the
    #     tail pad + in-kernel row masking + 2-block parallel grid -------------
    shape2 = (2, 3, 37, 41)
    d2 = jax.random.uniform(k4, shape2, jnp.float32, 0.0, 3.0)
    ch2 = jax.random.bernoulli(k5, 0.3, shape2)
    ig2 = jax.random.bernoulli(k6, 0.05, shape2)
    lab2 = jnp.where(ig2, jnp.uint8(255), ch2.astype(jnp.uint8))
    loss2 = bcl_loss(d2, lab2, margin=2.0)
    ref2 = _bcl_ref(d2, lab2, margin=2.0)
    assert np.allclose(float(loss2), ref2, rtol=1e-3, atol=1e-3), (float(loss2), ref2)

    # --- bf16 distance (reduced HBM traffic on v5e/v6e) -----------------------
    d_bf16 = distance.astype(jnp.bfloat16)
    loss_bf = bcl_loss(d_bf16, label_u8, margin=2.0)
    ref_bf = _bcl_ref(d_bf16.astype(jnp.float32), label_u8, margin=2.0)
    assert np.allclose(float(loss_bf), ref_bf, rtol=1e-3, atol=1e-3), (float(loss_bf), ref_bf)

    print("KERNEL_OK")
</pallas_src>

<mosaic_0001>
module attributes {stable_mosaic.version = 11 : i64} {
  func.func @_bcl_kernel(%arg0: i32, %arg1: memref<32x128xf32, #tpu.memory_space<vmem>>, %arg2: memref<32x128xi8, #tpu.memory_space<vmem>>, %arg3: memref<1x8x128xf32, #tpu.memory_space<vmem>>) attributes {dimension_semantics = [#tpu.dimension_semantics<parallel>], iteration_bounds = array<i64: 1>, scalar_prefetch = 0 : i64, scratch_operands = 0 : i64, tpu.core_type = #tpu.core_type<tc>, window_params = [{transform_indices = @transform_0, window_bounds = array<i64: 32, 128>}, {transform_indices = @transform_1, window_bounds = array<i64: 32, 128>}, {transform_indices = @transform_2, window_bounds = array<i64: 1, 8, 128>}]} {
    %c0 = arith.constant 0 : index
    %c0_0 = arith.constant 0 : index
    %0 = vector.load %arg2[%c0, %c0_0] : memref<32x128xi8, #tpu.memory_space<vmem>>, vector<32x128xi8>
    %1 = arith.extui %0 : vector<32x128xi8> to vector<32x128xi32>
    %c0_i32 = arith.constant 0 : i32
    %2 = vector.broadcast %c0_i32 : i32 to vector<32x128xi32>
    %3 = arith.cmpi eq, %1, %2 : vector<32x128xi32>
    %c1_i32 = arith.constant 1 : i32
    %4 = vector.broadcast %c1_i32 : i32 to vector<32x128xi32>
    %5 = arith.cmpi eq, %1, %4 : vector<32x128xi32>
    %c0_1 = arith.constant 0 : index
    %c0_2 = arith.constant 0 : index
    %6 = vector.load %arg1[%c0_1, %c0_2] : memref<32x128xf32, #tpu.memory_space<vmem>>, vector<32x128xf32>
    %7 = arith.extui %3 : vector<32x128xi1> to vector<32x128xi32>
    %8 = arith.sitofp %7 : vector<32x128xi32> to vector<32x128xf32>
    %9 = arith.extui %5 : vector<32x128xi1> to vector<32x128xi32>
    %10 = arith.sitofp %9 : vector<32x128xi32> to vector<32x128xf32>
    %11 = arith.mulf %6, %6 : vector<32x128xf32>
    %12 = arith.mulf %8, %11 : vector<32x128xf32>
    %cst = arith.constant 2.000000e+00 : f32
    %13 = vector.broadcast %cst : f32 to vector<32x128xf32>
    %14 = arith.subf %13, %6 : vector<32x128xf32>
    %cst_3 = arith.constant 0.000000e+00 : f32
    %15 = vector.broadcast %cst_3 : f32 to vector<32x128xf32>
    %16 = arith.maximumf %14, %15 : vector<32x128xf32>
    %17 = arith.mulf %16, %16 : vector<32x128xf32>
    %18 = arith.mulf %10, %17 : vector<32x128xf32>
    %cst_4 = arith.constant dense<0.000000e+00> : vector<128xf32>
    %19 = vector.multi_reduction <add>, %8, %cst_4 [0] : vector<32x128xf32> to vector<128xf32>
    %20 = vector.shape_cast %19 : vector<128xf32> to vector<1x128xf32>
    %cst_5 = arith.constant dense<0.000000e+00> : vector<128xf32>
    %21 = vector.multi_reduction <add>, %10, %cst_5 [0] : vector<32x128xf32> to vector<128xf32>
    %22 = vector.shape_cast %21 : vector<128xf32> to vector<1x128xf32>
    %cst_6 = arith.constant dense<0.000000e+00> : vector<128xf32>
    %23 = vector.multi_reduction <add>, %12, %cst_6 [0] : vector<32x128xf32> to vector<128xf32>
    %24 = vector.shape_cast %23 : vector<128xf32> to vector<1x128xf32>
    %cst_7 = arith.constant dense<0.000000e+00> : vector<128xf32>
    %25 = vector.multi_reduction <add>, %18, %cst_7 [0] : vector<32x128xf32> to vector<128xf32>
    %26 = vector.shape_cast %25 : vector<128xf32> to vector<1x128xf32>
    %cst_8 = arith.constant 0.000000e+00 : f32
    %27 = vector.broadcast %cst_8 : f32 to vector<4x128xf32>
    %28 = tpu.concatenate %20, %22, %24, %26, %27 in 0 : vector<1x128xf32>, vector<1x128xf32>, vector<1x128xf32>, vector<1x128xf32>, vector<4x128xf32> -> vector<8x128xf32>
    %c0_9 = arith.constant 0 : index
    %c0_10 = arith.constant 0 : index
    %c0_11 = arith.constant 0 : index
    %29 = vector.load %arg3[%c0_9, %c0_10, %c0_11] : memref<1x8x128xf32, #tpu.memory_space<vmem>>, vector<1x8x128xf32>
    %30 = vector.shape_cast %29 : vector<1x8x128xf32> to vector<8x128xf32>
    %31 = vector.shape_cast %28 : vector<8x128xf32> to vector<1x8x128xf32>
    tpu.vector_store %arg3[%c0_9, %c0_10, %c0_11], %31 {strides = array<i32>} : memref<1x8x128xf32, #tpu.memory_space<vmem>>, vector<1x8x128xf32>,
    return
  }
  func.func @transform_0(%arg0: i32) -> (i32, i32) {
    %c0_i32 = arith.constant 0 : i32
    %c0_i32_0 = arith.constant 0 : i32
    return %arg0, %c0_i32 : i32, i32
  }
  func.func @transform_1(%arg0: i32) -> (i32, i32) {
    %c0_i32 = arith.constant 0 : i32
    %c0_i32_0 = arith.constant 0 : i32
    return %arg0, %c0_i32 : i32, i32
  }
  func.func @transform_2(%arg0: i32) -> (i32, i32, i32) {
    %c0_i32 = arith.constant 0 : i32
    %c0_i32_0 = arith.constant 0 : i32
    %c0_i32_1 = arith.constant 0 : i32
    return %arg0, %c0_i32, %c0_i32_0 : i32, i32, i32
  }
}

</mosaic_0001>

<llo_original>
// kernel: tpu_custom_call.1
$region0: #{tpu_custom_call.1}
  #allocation0 [shape = 'u32[]', space=smem, size = 0x4, offset = 0x4, fixed_abs, tag = 'smem constant byte address 0x4 - core index']
  #allocation1 [shape = 'u32[144,128]{1,0:T(1,128)}', space=vmem, size = 0x12000, scoped, tag = 'internal scratch']
  %s0 = inlined_call_operand.hbm [shape: f32[32,128], index: 0, kind: input, shape index: {}]
  %s1 = inlined_call_operand.hbm [shape: u8[32,128], index: 1, kind: input, shape index: {}]
  %s2 = inlined_call_operand.hbm [shape: f32[1,8,128], index: 2, kind: output, shape index: {}]
  %s3 = sld [smem:[#allocation0]]
  $region26: #{tpu_custom_call.1} parent=0
    _
  %s5 = ssub.s32 1, %s3
  %s6 = scalar_select 0, %s5, %s3
  $region1: #{tpu_custom_call.1} parent=0
    #allocation2 [shape = 'u8[16384]{0}', space=vmem, size = 0x4000, scoped, tag = 'input window, operand 0, single buffered']
    #allocation3 [shape = 's32[1]{0}', space=sflag, size = 0x4, scoped, tag = 'scoped memory for tpu_custom_call.1']
    #allocation4 [shape = 's32[1]{0}', space=sflag, size = 0x4, scoped, tag = 'scoped memory for tpu_custom_call.1']
    #allocation5 [shape = 'u8[4096]{0}', space=vmem, size = 0x1000, scoped, tag = 'input window, operand 1, single buffered']
    #allocation6 [shape = 's32[1]{0}', space=sflag, size = 0x4, scoped, tag = 'scoped memory for tpu_custom_call.1']
    #allocation7 [shape = 'u8[4096]{0}', space=vmem, size = 0x1000, scoped, tag = 'output window, operand 0, single buffered']
    %7 = vsyncpa [#allocation3], 0
    %8 = vsyncpa [#allocation6], 0
    %9 = vsyncpa [#allocation4], 0
    // Predicated region
    $region2: #{tpu_custom_call.1} parent=1 // pred_check
      _
    $region3: #{tpu_custom_call.1} parent=1 // pred_check_branch
      %11 = sbr.rel (0) target = $region5
    $region4: #{tpu_custom_call.1} parent=1 // pred_region
      %s13 = ssub.s32 512, 512
      %14 = vsyncadd [#allocation3], %s13
      %s15 = sshll.u32 [#allocation2], 4
      %s16 = int_to_ptr.vmem [resolvable:$true] %s15
      %21 = dma.hbm_to_vmem [thread:$0]  %s0, 512, %s16, [#allocation3], 128, 128, 8
    $region5: #{tpu_custom_call.1} parent=1 // pred_fallthru
      _
    // Predicated region
    $region6: #{tpu_custom_call.1} parent=1 // pred_check
      _
    $region7: #{tpu_custom_call.1} parent=1 // pred_check_branch
      %23 = sbr.rel (0) target = $region9
    $region8: #{tpu_custom_call.1} parent=1 // pred_region
      %s25 = ssub.s32 128, 128
      %26 = vsyncadd [#allocation6], %s25
      %s28 = sshll.u32 [#allocation5], 4
      %s29 = int_to_ptr.vmem [resolvable:$true] %s28
      %31 = dma.hbm_to_vmem [thread:$0]  %s1, 128, %s29, [#allocation6]
    $region9: #{tpu_custom_call.1} parent=1 // pred_fallthru
      _
    // Predicated region
    $region10: #{tpu_custom_call.1} parent=1 // pred_check
      _
    $region11: #{tpu_custom_call.1} parent=1 // pred_check_branch
      %33 = sbr.rel (0) target = $region13
    $region12: #{tpu_custom_call.1} parent=1 // pred_region
      %34 = dma.done [#allocation3], 512
    $region13: #{tpu_custom_call.1} parent=1 // pred_fallthru
      _
    // Predicated region
    $region14: #{tpu_custom_call.1} parent=1 // pred_check
      _
    $region15: #{tpu_custom_call.1} parent=1 // pred_check_branch
      %36 = sbr.rel (0) target = $region17
    $region16: #{tpu_custom_call.1} parent=1 // pred_region
      %37 = dma.done [#allocation6], 128
    $region17: #{tpu_custom_call.1} parent=1 // pred_fallthru
      _
    %v38 = vld [vmem:[#allocation5] sm:$0xff]
    %v39 = vunpack.c.0.s8 %v38
    %v40 = vunpack.c.1.s8 %v38
    %v41 = vunpack.c.2.s8 %v38
    %v42 = vunpack.c.3.s8 %v38
    %v43 = vand.u32 %v39, 255
    %v44 = vand.u32 %v40, 255
    %v45 = vand.u32 %v41, 255
    %v46 = vand.u32 %v42, 255
    %vm47 = vcmp.eq.s32.totalorder %v43, 0
    %vm48 = vcmp.eq.s32.totalorder %v44, 0
    %vm49 = vcmp.eq.s32.totalorder %v45, 0
    %vm50 = vcmp.eq.s32.totalorder %v46, 0
    %vm51 = vcmp.eq.s32.totalorder %v43, 1
    %vm52 = vcmp.eq.s32.totalorder %v44, 1
    %vm53 = vcmp.eq.s32.totalorder %v45, 1
    %vm54 = vcmp.eq.s32.totalorder %v46, 1
    %v55 = vld [vmem:[#allocation2] sm:$0xff]
    %v56 = vld [vmem:[#allocation2 + $0x8] sm:$0xff]
    %v57 = vld [vmem:[#allocation2 + $0x10] sm:$0xff]
    %v58 = vld [vmem:[#allocation2 + $0x18] sm:$0xff]
    %v59 = vsel %vm47, 1, 0
    %v60 = vsel %vm48, 1, 0
    %v61 = vsel %vm49, 1, 0
    %v62 = vsel %vm50, 1, 0
    %v63 = vcvt.s32.f32 %v59
    %v64 = vcvt.s32.f32 %v60
    %v65 = vcvt.s32.f32 %v61
    %v66 = vcvt.s32.f32 %v62
    %v67 = vsel %vm51, 1, 0
    %v68 = vsel %vm52, 1, 0
    %v69 = vsel %vm53, 1, 0
    %v70 = vsel %vm54, 1, 0
    %v71 = vcvt.s32.f32 %v67
    %v72 = vcvt.s32.f32 %v68
    %v73 = vcvt.s32.f32 %v69
    %v74 = vcvt.s32.f32 %v70
    %v75 = vmul.f32 %v55, %v55
    %v76 = vmul.f32 %v56, %v56
    %v77 = vmul.f32 %v57, %v57
    %v78 = vmul.f32 %v58, %v58
    %v79 = vmul.f32 %v63, %v75
    %v80 = vmul.f32 %v64, %v76
    %v81 = vmul.f32 %v65, %v77
    %v82 = vmul.f32 %v66, %v78
    %v83 = vsub.f32 2.0, %v55
    %v84 = vsub.f32 2.0, %v56
    %v85 = vsub.f32 2.0, %v57
    %v86 = vsub.f32 2.0, %v58
    %v87 = vmax.f32 %v83, 0.0
    %v88 = vmax.f32 %v84, 0.0
    %v89 = vmax.f32 %v85, 0.0
    %v90 = vmax.f32 %v86, 0.0
    %v91 = vmul.f32 %v87, %v87
    %v92 = vmul.f32 %v88, %v88
    %v93 = vmul.f32 %v89, %v89
    %v94 = vmul.f32 %v90, %v90
    %v95 = vmul.f32 %v71, %v91
    %v96 = vmul.f32 %v72, %v92
    %v97 = vmul.f32 %v73, %v93
    %v98 = vmul.f32 %v74, %v94
    %v99 = vadd.f32 %v63, %v64
    %v100 = vadd.f32 %v99, %v65
    %v101 = vadd.f32 %v100, %v66
    %v102 = vrot.slane %v101, 4
    %v103 = vadd.f32 %v101, %v102
    %v104 = vrot.slane %v103, 2
    %v105 = vadd.f32 %v103, %v104
    %v106 = vrot.slane %v105, 1
    %v107 = vadd.f32 %v105, %v106
    %v108 = vadd.f32 %v71, %v72
    %v109 = vadd.f32 %v108, %v73
    %v110 = vadd.f32 %v109, %v74
    %v111 = vrot.slane %v110, 4
    %v112 = vadd.f32 %v110, %v111
    %v113 = vrot.slane %v112, 2
    %v114 = vadd.f32 %v112, %v113
    %v115 = vrot.slane %v114, 1
    %v116 = vadd.f32 %v114, %v115
    %v117 = vadd.f32 %v79, %v80
    %v118 = vadd.f32 %v117, %v81
    %v119 = vadd.f32 %v118, %v82
    %v120 = vrot.slane %v119, 4
    %v121 = vadd.f32 %v119, %v120
    %v122 = vrot.slane %v121, 2
    %v123 = vadd.f32 %v121, %v122
    %v124 = vrot.slane %v123, 1
    %v125 = vadd.f32 %v123, %v124
    %v126 = vadd.f32 %v95, %v96
    %v127 = vadd.f32 %v126, %v97
    %v128 = vadd.f32 %v127, %v98
    %v129 = vrot.slane %v128, 4
    %v130 = vadd.f32 %v128, %v129
    %v131 = vrot.slane %v130, 2
    %v132 = vadd.f32 %v130, %v131
    %v133 = vrot.slane %v132, 1
    %v134 = vadd.f32 %v132, %v133
    %vm135 = vcmask 1040384
    %v136 = vsel %vm135, %v107, %v116
    %vm137 = vcmask 1041408
    %v138 = vsel %vm137, %v136, %v125
    %vm139 = vcmask 1042432
    %v140 = vsel %vm139, %v138, %v134
    %vm141 = vcmask 1043456
    %v142 = vsel %vm141, %v140, 0.0
    %143 = vst [vmem:[#allocation7] sm:$0xff] %v142
    // Predicated region
    $region18: #{tpu_custom_call.1} parent=1 // pred_check
      _
    $region19: #{tpu_custom_call.1} parent=1 // pred_check_branch
      %145 = sbr.rel (0) target = $region21
    $region20: #{tpu_custom_call.1} parent=1 // pred_region
      %s147 = ssub.s32 128, 128
      %148 = vsyncadd [#allocation4], %s147
      %s150 = sshll.u32 [#allocation7], 4
      %s151 = int_to_ptr.vmem [resolvable:$true] %s150
      %153 = dma.vmem_to_hbm [thread:$0]  %s151, 128, %s2, [#allocation4]
    $region21: #{tpu_custom_call.1} parent=1 // pred_fallthru
      _
    // Predicated region
    $region22: #{tpu_custom_call.1} parent=1 // pred_check
      _
    $region23: #{tpu_custom_call.1} parent=1 // pred_check_branch
      %155 = sbr.rel (0) target = $region25
    $region24: #{tpu_custom_call.1} parent=1 // pred_region
      %156 = dma.done [#allocation4], 128
    $region25: #{tpu_custom_call.1} parent=1 // pred_fallthru
      _
    %157 = vsyncpa [#allocation3], 1
    %158 = vsyncpa [#allocation6], 1
    %159 = vsyncpa [#allocation4], 1

</llo_original>
